<compile_context>
chip_gen: v6e
topology: v6e:2x2x1
jax: 0.10.0
libtpu: 0.0.40
codegen_flags: <defaults>
</compile_context>

<pallas_src>
import functools
import math

import jax
import jax.numpy as jnp
from jax.experimental import pallas as pl
from jax.experimental.pallas import tpu as pltpu

_LANE = 128
_SUBLANE = 8
_MIB = 1024 * 1024


def _round_up(v, m):
    return ((v + m - 1) // m) * m


def _pick_tk(dff_p, tk_req):
    """Largest multiple of 128 that divides dff_p and is <= tk_req."""
    q = dff_p // _LANE
    r = max(1, tk_req // _LANE)
    best = 1
    for d in range(1, q + 1):
        if q % d == 0 and d <= r:
            best = d
    return _LANE * best


@functools.lru_cache(maxsize=1)
def _tpu_defaults():
    """(tm_default, tk_default, vmem_cap_bytes, is_v7) for the current backend."""
    kind = ""
    try:
        kind = jax.devices()[0].device_kind.lower()
    except Exception:
        pass
    vmem_bytes = None
    try:
        info = pltpu.get_tpu_info()
        vmem_bytes = getattr(info, "vmem_capacity_bytes", None)
    except Exception:
        pass
    is_v7 = "v7" in kind
    if vmem_bytes is None:
        vmem_bytes = 64 * _MIB if is_v7 else 128 * _MIB

    if is_v7:
        # 64 MiB physical VMEM per TC; keep tiles modest, budget <= ~56 MiB.
        tm, tk = 512, 256
        cap = min(max(vmem_bytes - 8 * _MIB, 32 * _MIB), 56 * _MIB)
    elif "v6" in kind:
        # 918 TF/s vs ~1.5 TB/s HBM -> need big token tiles; 128 MiB VMEM allows it.
        tm, tk = 1024, 512
        cap = 100 * _MIB
    elif "v5" in kind:
        tm, tk = 512, 512
        cap = 100 * _MIB
    else:
        tm, tk = 512, 512
        cap = min(100 * _MIB, max(32 * _MIB, vmem_bytes - 28 * _MIB))
    return tm, tk, int(cap), is_v7


# ---------------------------------------------------------------------------
# Kernels
# ---------------------------------------------------------------------------

def _ff_fused_kernel(x_ref, w1_ref, b1_ref, w2_ref, b2_ref, o_ref):
    """Weight-resident path: whole d_ff processed per token tile."""
    h = jnp.dot(x_ref[...], w1_ref[...], preferred_element_type=jnp.float32)
    h = jnp.maximum(h + b1_ref[...], 0.0)
    # Dropout is identity in eval mode (PyTorch nn.Dropout only drops in train()).
    # TODO(synk): training-mode dropout would use pltpu.prng_seed + stateful_bernoulli.
    y = jnp.dot(h.astype(w2_ref.dtype), w2_ref[...],
                preferred_element_type=jnp.float32)
    o_ref[...] = (y + b2_ref[...]).astype(o_ref.dtype)


def _ff_reduce_f32out_kernel(x_ref, w1_ref, b1_ref, w2_ref, b2_ref, o_ref):
    """d_ff-reduction path, f32 output: accumulate directly into o_ref (no scratch)."""
    k = pl.program_id(1)

    @pl.when(k == 0)
    def _():
        o_ref[...] = jnp.broadcast_to(b2_ref[...], o_ref.shape).astype(o_ref.dtype)

    h = jnp.dot(x_ref[...], w1_ref[...], preferred_element_type=jnp.float32)
    h = jnp.maximum(h + b1_ref[...], 0.0)
    # Fused add into the resident output block (MRB accumulation friendly on v7x).
    o_ref[...] += jnp.dot(h.astype(w2_ref.dtype), w2_ref[...],
                          preferred_element_type=jnp.float32)


def _ff_reduce_acc_kernel(x_ref, w1_ref, b1_ref, w2_ref, b2_ref, o_ref, acc_ref):
    """d_ff-reduction path, non-f32 output: f32 VMEM accumulator + finalize cast."""
    k = pl.program_id(1)

    @pl.when(k == 0)
    def _():
        acc_ref[...] = jnp.zeros_like(acc_ref)

    h = jnp.dot(x_ref[...], w1_ref[...], preferred_element_type=jnp.float32)
    h = jnp.maximum(h + b1_ref[...], 0.0)
    acc_ref[...] += jnp.dot(h.astype(w2_ref.dtype), w2_ref[...],
                            preferred_element_type=jnp.float32)

    @pl.when(k == pl.num_programs(1) - 1)
    def _():
        o_ref[...] = (acc_ref[...] + b2_ref[...]).astype(o_ref.dtype)


# ---------------------------------------------------------------------------
# Wrappers
# ---------------------------------------------------------------------------

def prepare_params(w1, b1, w2, b2, compute_dtype=None):
    """Pad feature axes to multiples of 128 and cast once (hoisted out of the call)."""
    d_model, d_ff = w1.shape
    cdt = jnp.dtype(compute_dtype) if compute_dtype is not None else jnp.dtype(w1.dtype)
    dm_p = _round_up(d_model, _LANE)
    dff_p = _round_up(d_ff, _LANE)
    w1_p = jnp.zeros((dm_p, dff_p), cdt).at[:d_model, :d_ff].set(w1.astype(cdt))
    w2_p = jnp.zeros((dff_p, dm_p), cdt).at[:d_ff, :d_model].set(w2.astype(cdt))
    b1_p = jnp.zeros((1, dff_p), jnp.float32).at[0, :d_ff].set(b1.astype(jnp.float32))
    b2_p = jnp.zeros((1, dm_p), jnp.float32).at[0, :d_model].set(b2.astype(jnp.float32))
    return dict(w1=w1_p, b1=b1_p, w2=w2_p, b2=b2_p,
                d_model=d_model, d_ff=d_ff, compute_dtype=cdt)


def feed_forward_prepared(x, params, *, tm=None, tk=None, weight_resident=None,
                          vmem_limit_bytes=None):
    """Apply the feed-forward to x (any leading dims, last dim = d_model)."""
    d_model = params["d_model"]
    cdt = params["compute_dtype"]
    w1_p, b1_p, w2_p, b2_p = params["w1"], params["b1"], params["w2"], params["b2"]
    dm_p, dff_p = w1_p.shape

    orig_shape = x.shape
    assert orig_shape[-1] == d_model, "last dim of x must be d_model"
    T = 1
    for s in orig_shape[:-1]:
        T *= s
    x2 = x.reshape(T, d_model)
    out_dtype = x.dtype

    isz = cdt.itemsize
    osz = jnp.dtype(out_dtype).itemsize
    f32_out = jnp.dtype(out_dtype) == jnp.dtype(jnp.float32)

    tm_def, tk_def, cap, is_v7 = _tpu_defaults()
    if tm is None:
        tm = tm_def
    if tk is None:
        tk = tk_def

    # Row tile: multiple of 8 (sublane), no larger than the padded token count.
    tm = max(_SUBLANE, _round_up(min(tm, _round_up(T, _SUBLANE)), _SUBLANE))
    # v7x has 2 TensorCores: make sure the "parallel" token axis has >= 2 tiles
    # whenever there is enough work to split.
    if is_v7 and T > 2 * _SUBLANE and T <= tm:
        tm = max(_SUBLANE, _round_up((T + 1) // 2, _SUBLANE))

    # --- weight-resident fast path feasibility -----------------------------------
    def fast_footprint(tm_):
        return (2 * dm_p * dff_p * isz          # W1 (pipeline buffers, DMA'd once)
                + 2 * dff_p * dm_p * isz        # W2
                + 2 * (dff_p + dm_p) * 4        # biases
                + 2 * tm_ * dm_p * isz          # x tiles (double buffered)
                + 2 * tm_ * dm_p * osz          # out tiles
                + tm_ * dff_p * 4)              # f32 hidden intermediate

    if weight_resident is None:
        use_fast = fast_footprint(tm) <= cap
    else:
        use_fast = bool(weight_resident)

    compiler_flops = 4 * T * dm_p * dff_p  # two matmuls, 2*M*K*N each (approx)
    w_bytes_once = (dm_p * dff_p + dff_p * dm_p) * isz + (dff_p + dm_p) * 4

    if use_fast:
        T_p = _round_up(T, tm)
        footprint = fast_footprint(tm)
        grid = (T_p // tm,)
        kernel = _ff_fused_kernel
        in_specs = [
            pl.BlockSpec((tm, dm_p), lambda i: (i, 0)),     # x row tile
            pl.BlockSpec((dm_p, dff_p), lambda i: (0, 0)),  # W1 (resident)
            pl.BlockSpec((1, dff_p), lambda i: (0, 0)),     # b1
            pl.BlockSpec((dff_p, dm_p), lambda i: (0, 0)),  # W2 (resident)
            pl.BlockSpec((1, dm_p), lambda i: (0, 0)),      # b2
        ]
        out_specs = pl.BlockSpec((tm, dm_p), lambda i: (i, 0))
        scratch = []
        semantics = ("parallel",)
        bytes_accessed = (T_p * dm_p * isz + w_bytes_once + T_p * dm_p * osz)
    else:
        # --- d_ff reduction path --------------------------------------------------
        tk = _pick_tk(dff_p, tk)

        def red_footprint(tm_, tk_):
            fp = (2 * tm_ * dm_p * isz          # x tile
                  + 2 * dm_p * tk_ * isz        # W1 chunk
                  + 2 * tk_ * dm_p * isz        # W2 chunk
                  + 2 * tk_ * 4 + 2 * dm_p * 4  # bias chunks
                  + 2 * tm_ * dm_p * osz        # out tile
                  + tm_ * tk_ * 4)              # f32 hidden chunk
            if not f32_out:
                fp += tm_ * dm_p * 4            # accumulator scratch
            return fp

        # Shrink tk first (keeps arithmetic intensity ~ tm), then tm, to fit VMEM.
        while red_footprint(tm, tk) > cap and tk > _LANE:
            tk = _pick_tk(dff_p, tk // 2)
        while red_footprint(tm, tk) > cap and tm > _LANE:
            tm = max(_LANE, _round_up(tm // 2, _SUBLANE))

        T_p = _round_up(T, tm)
        footprint = red_footprint(tm, tk)
        grid = (T_p // tm, dff_p // tk)
        in_specs = [
            pl.BlockSpec((tm, dm_p), lambda i, k: (i, 0)),   # x row tile
            pl.BlockSpec((dm_p, tk), lambda i, k: (0, k)),   # W1 d_ff chunk
            pl.BlockSpec((1, tk), lambda i, k: (0, k)),      # b1 chunk
            pl.BlockSpec((tk, dm_p), lambda i, k: (k, 0)),   # W2 d_ff chunk
            pl.BlockSpec((1, dm_p), lambda i, k: (0, 0)),    # b2
        ]
        out_specs = pl.BlockSpec((tm, dm_p), lambda i, k: (i, 0))
        if f32_out:
            kernel = _ff_reduce_f32out_kernel
            scratch = []
        else:
            kernel = _ff_reduce_acc_kernel
            scratch = [pltpu.VMEM((tm, dm_p), jnp.float32)]
        semantics = ("parallel", "arbitrary")
        # Weights are re-streamed once per token tile.
        bytes_accessed = (T_p * dm_p * isz
                          + (T_p // tm) * w_bytes_once
                          + T_p * dm_p * osz)

    if vmem_limit_bytes is None:
        vmem_limit_bytes = int(min(cap, max(32 * _MIB, footprint * 5 // 4)))
    vmem_limit_bytes = int(vmem_limit_bytes)

    cost = pl.CostEstimate(flops=int(compiler_flops), transcendentals=0,
                           bytes_accessed=int(bytes_accessed))

    # Pad the activations (zeros are exact: padded hidden units hit ReLU(0)=0 and
    # zero rows of W2; padded output rows/cols are sliced off below).
    if (T_p, dm_p) == (T, d_model) and x2.dtype == cdt:
        x_p = x2
    else:
        x_p = jnp.zeros((T_p, dm_p), cdt).at[:T, :d_model].set(x2.astype(cdt))

    out_p = pl.pallas_call(
        kernel,
        out_shape=jax.ShapeDtypeStruct((T_p, dm_p), out_dtype),
        grid_spec=pltpu.PrefetchScalarGridSpec(
            num_scalar_prefetch=0,
            grid=grid,
            in_specs=in_specs,
            out_specs=out_specs,
            scratch_shapes=scratch,
        ),
        compiler_params=pltpu.CompilerParams(
            dimension_semantics=semantics,
            vmem_limit_bytes=vmem_limit_bytes,
        ),
        cost_estimate=cost,
    )(x_p, w1_p, b1_p, w2_p, b2_p)

    return out_p[:T, :d_model].reshape(orig_shape)


def feed_forward(x, w1, b1, w2, b2, *, compute_dtype=None, **kw):
    """Convenience one-shot call (pads/casts weights on every call)."""
    params = prepare_params(w1, b1, w2, b2, compute_dtype=compute_dtype)
    return feed_forward_prepared(x, params, **kw)


def make_feed_forward(w1, b1, w2, b2, *, compute_dtype=None, **kw):
    """Pad/cast the weights ONCE and return a jitted apply(x) (the fast path)."""
    params = prepare_params(w1, b1, w2, b2, compute_dtype=compute_dtype)
    padded = (params["w1"], params["b1"], params["w2"], params["b2"])
    meta = {k: params[k] for k in ("d_model", "d_ff", "compute_dtype")}

    @jax.jit
    def _apply(xv, w1_p, b1_p, w2_p, b2_p):
        p = dict(meta, w1=w1_p, b1=b1_p, w2=w2_p, b2=b2_p)
        return feed_forward_prepared(xv, p, **kw)

    return lambda xv: _apply(xv, *padded)


def init_params(key, d_model, d_ff, dtype=jnp.float32):
    """Deterministic init mirroring nn.Linear default (uniform +/- 1/sqrt(fan_in))."""
    k1, k2, k3, k4 = jax.random.split(key, 4)
    bound1 = 1.0 / math.sqrt(d_model)
    bound2 = 1.0 / math.sqrt(d_ff)
    # Stored transposed relative to PyTorch's [out, in] so the kernel does x @ W.
    w1 = jax.random.uniform(k1, (d_model, d_ff), dtype, -bound1, bound1)
    b1 = jax.random.uniform(k2, (d_ff,), dtype, -bound1, bound1)
    w2 = jax.random.uniform(k3, (d_ff, d_model), dtype, -bound2, bound2)
    b2 = jax.random.uniform(k4, (d_model,), dtype, -bound2, bound2)
    return w1, b1, w2, b2


if __name__ == "__main__":
    key = jax.random.PRNGKey(0)
    batch, seq, d_model, d_ff = 2, 8, 32, 256

    kx, kp = jax.random.split(key)
    x = jax.random.normal(kx, (batch, seq, d_model), jnp.float32)
    w1, b1, w2, b2 = init_params(kp, d_model, d_ff)

    def ref_fn(xv):
        h = jnp.maximum(xv.reshape(-1, d_model) @ w1 + b1, 0.0)
        return (h @ w2 + b2).reshape(xv.shape)

    ref = ref_fn(x)

    # 1) Weight-resident fused path, f32, weights padded/cast once + jitted apply.
    ff = make_feed_forward(w1, b1, w2, b2)
    out = ff(x)
    jax.block_until_ready(out)
    assert out.shape == x.shape
    assert jnp.allclose(out, ref, atol=1e-4, rtol=1e-4), "mismatch (fused f32)"

    # 2) Forced d_ff-reduction path (tk=128 -> 2 k steps), f32 output accumulates
    #    directly into o_ref (no scratch).
    out_red = feed_forward(x, w1, b1, w2, b2, tk=128, weight_resident=False)
    jax.block_until_ready(out_red)
    assert jnp.allclose(out_red, ref, atol=1e-4, rtol=1e-4), "mismatch (reduction f32)"

    # 3) bf16 compute (f32 accumulation) on the fused path.
    ff_bf16 = make_feed_forward(w1, b1, w2, b2, compute_dtype=jnp.bfloat16)
    out_bf = ff_bf16(x)
    jax.block_until_ready(out_bf)
    assert jnp.allclose(out_bf, ref, atol=3e-2, rtol=3e-2), "mismatch (fused bf16)"

    # 4) Reduction path with bf16 output -> exercises the f32 accumulator scratch.
    out_bf_red = feed_forward(x.astype(jnp.bfloat16), w1, b1, w2, b2,
                              compute_dtype=jnp.bfloat16, tk=128,
                              weight_resident=False)
    jax.block_until_ready(out_bf_red)
    assert jnp.allclose(out_bf_red.astype(jnp.float32), ref,
                        atol=6e-2, rtol=6e-2), "mismatch (reduction bf16)"

    print("KERNEL_OK")
</pallas_src>

<mosaic_0001>
module attributes {stable_mosaic.version = 11 : i64} {
  func.func @_ff_fused_kernel(%arg0: i32, %arg1: memref<16x128xf32, #tpu.memory_space<vmem>>, %arg2: memref<128x256xf32, #tpu.memory_space<vmem>>, %arg3: memref<1x256xf32, #tpu.memory_space<vmem>>, %arg4: memref<256x128xf32, #tpu.memory_space<vmem>>, %arg5: memref<1x128xf32, #tpu.memory_space<vmem>>, %arg6: memref<16x128xf32, #tpu.memory_space<vmem>>) attributes {dimension_semantics = [#tpu.dimension_semantics<parallel>], iteration_bounds = array<i64: 1>, scalar_prefetch = 0 : i64, scratch_operands = 0 : i64, tpu.core_type = #tpu.core_type<tc>, window_params = [{transform_indices = @transform_0, window_bounds = array<i64: 16, 128>}, {pipeline_mode = #tpu.pipeline_mode<synchronous>, transform_indices = @transform_1, window_bounds = array<i64: 128, 256>}, {pipeline_mode = #tpu.pipeline_mode<synchronous>, transform_indices = @transform_2, window_bounds = array<i64: 1, 256>}, {pipeline_mode = #tpu.pipeline_mode<synchronous>, transform_indices = @transform_3, window_bounds = array<i64: 256, 128>}, {pipeline_mode = #tpu.pipeline_mode<synchronous>, transform_indices = @transform_4, window_bounds = array<i64: 1, 128>}, {transform_indices = @transform_5, window_bounds = array<i64: 16, 128>}]} {
    %c0 = arith.constant 0 : index
    %c0_0 = arith.constant 0 : index
    %0 = vector.load %arg1[%c0, %c0_0] : memref<16x128xf32, #tpu.memory_space<vmem>>, vector<16x128xf32>
    %c0_1 = arith.constant 0 : index
    %c0_2 = arith.constant 0 : index
    %1 = vector.load %arg2[%c0_1, %c0_2] : memref<128x256xf32, #tpu.memory_space<vmem>>, vector<128x256xf32>
    %cst = arith.constant dense<0.000000e+00> : vector<16x256xf32>
    %2 = tpu.matmul %0, %1, %cst {dimension_numbers = #tpu.dot_dimension_numbers<[1], [0], [0], [1], [0, 0, 1, 1], [], []>} : vector<16x128xf32>, vector<128x256xf32>, vector<16x256xf32> -> vector<16x256xf32>
    %c0_3 = arith.constant 0 : index
    %c0_4 = arith.constant 0 : index
    %3 = vector.load %arg3[%c0_3, %c0_4] : memref<1x256xf32, #tpu.memory_space<vmem>>, vector<1x256xf32>
    %4 = vector.broadcast %3 : vector<1x256xf32> to vector<16x256xf32>
    %5 = arith.addf %2, %4 : vector<16x256xf32>
    %cst_5 = arith.constant 0.000000e+00 : f32
    %6 = vector.broadcast %cst_5 : f32 to vector<16x256xf32>
    %7 = arith.maximumf %5, %6 : vector<16x256xf32>
    %c0_6 = arith.constant 0 : index
    %c0_7 = arith.constant 0 : index
    %8 = vector.load %arg4[%c0_6, %c0_7] : memref<256x128xf32, #tpu.memory_space<vmem>>, vector<256x128xf32>
    %cst_8 = arith.constant dense<0.000000e+00> : vector<16x128xf32>
    %9 = tpu.matmul %7, %8, %cst_8 {dimension_numbers = #tpu.dot_dimension_numbers<[1], [0], [0], [1], [0, 0, 1, 1], [], []>} : vector<16x256xf32>, vector<256x128xf32>, vector<16x128xf32> -> vector<16x128xf32>
    %c0_9 = arith.constant 0 : index
    %c0_10 = arith.constant 0 : index
    %10 = vector.load %arg5[%c0_9, %c0_10] : memref<1x128xf32, #tpu.memory_space<vmem>>, vector<1x128xf32>
    %11 = vector.broadcast %10 : vector<1x128xf32> to vector<16x128xf32>
    %12 = arith.addf %9, %11 : vector<16x128xf32>
    %c0_11 = arith.constant 0 : index
    %c0_12 = arith.constant 0 : index
    %13 = vector.load %arg6[%c0_11, %c0_12] : memref<16x128xf32, #tpu.memory_space<vmem>>, vector<16x128xf32>
    tpu.vector_store %arg6[%c0_11, %c0_12], %12 {strides = array<i32>} : memref<16x128xf32, #tpu.memory_space<vmem>>, vector<16x128xf32>,
    return
  }
  func.func @transform_0(%arg0: i32) -> (i32, i32) {
    %c0_i32 = arith.constant 0 : i32
    %c0_i32_0 = arith.constant 0 : i32
    return %arg0, %c0_i32 : i32, i32
  }
  func.func @transform_1(%arg0: i32) -> (i32, i32) {
    %c0_i32 = arith.constant 0 : i32
    %c0_i32_0 = arith.constant 0 : i32
    %c0_i32_1 = arith.constant 0 : i32
    return %c0_i32, %c0_i32_0 : i32, i32
  }
  func.func @transform_2(%arg0: i32) -> (i32, i32) {
    %c0_i32 = arith.constant 0 : i32
    %c0_i32_0 = arith.constant 0 : i32
    %c0_i32_1 = arith.constant 0 : i32
    return %c0_i32, %c0_i32_0 : i32, i32
  }
  func.func @transform_3(%arg0: i32) -> (i32, i32) {
    %c0_i32 = arith.constant 0 : i32
    %c0_i32_0 = arith.constant 0 : i32
    %c0_i32_1 = arith.constant 0 : i32
    return %c0_i32, %c0_i32_0 : i32, i32
  }
  func.func @transform_4(%arg0: i32) -> (i32, i32) {
    %c0_i32 = arith.constant 0 : i32
    %c0_i32_0 = arith.constant 0 : i32
    %c0_i32_1 = arith.constant 0 : i32
    return %c0_i32, %c0_i32_0 : i32, i32
  }
  func.func @transform_5(%arg0: i32) -> (i32, i32) {
    %c0_i32 = arith.constant 0 : i32
    %c0_i32_0 = arith.constant 0 : i32
    return %arg0, %c0_i32 : i32, i32
  }
}

</mosaic_0001>

<llo_original>
// kernel: _apply.1
$region0: #{_apply.1}
  #allocation0 [shape = 'u32[]', space=smem, size = 0x4, offset = 0x4, fixed_abs, tag = 'smem constant byte address 0x4 - core index']
  #allocation1 [shape = 'u32[144,128]{1,0:T(1,128)}', space=vmem, size = 0x12000, scoped, tag = 'internal scratch']
  %s0 = inlined_call_operand.vmem [shape: f32[16,128], index: 0, kind: input, shape index: {}]
  %s1 = inlined_call_operand.hbm [shape: f32[128,256], index: 1, kind: input, shape index: {}]
  %s2 = inlined_call_operand.vmem [shape: f32[1,256], index: 2, kind: input, shape index: {}]
  %s3 = inlined_call_operand.hbm [shape: f32[256,128], index: 3, kind: input, shape index: {}]
  %s4 = inlined_call_operand.vmem [shape: f32[1,128], index: 4, kind: input, shape index: {}]
  %s5 = inlined_call_operand.vmem [shape: f32[16,128], index: 5, kind: output, shape index: {}]
  %s6 = sld [smem:[#allocation0]]
  $region38: #{_apply.1} parent=0
    _
  %s8 = ssub.s32 1, %s6
  %s9 = scalar_select 0, %s8, %s6
  $region1: #{_apply.1} parent=0
    #allocation2 [shape = 'u8[131072]{0}', space=vmem, size = 0x20000, scoped, tag = 'input window, operand 1, single buffered']
    #allocation3 [shape = 's32[1]{0}', space=sflag, size = 0x4, scoped, tag = 'scoped memory for _apply.1']
    #allocation4 [shape = 'u8[131072]{0}', space=vmem, size = 0x20000, scoped, tag = 'input window, operand 3, single buffered']
    #allocation5 [shape = 's32[1]{0}', space=sflag, size = 0x4, scoped, tag = 'scoped memory for _apply.1']
    %10 = vsyncpa [#allocation3], 0
    %11 = vsyncpa [#allocation5], 0
    // Predicated region
    $region2: #{_apply.1} parent=1 // pred_check
      _
    $region3: #{_apply.1} parent=1 // pred_check_branch
      %13 = sbr.rel (0) target = $region5
    $region4: #{_apply.1} parent=1 // pred_region
      _
    $region5: #{_apply.1} parent=1 // pred_fallthru
      _
    // Predicated region
    $region6: #{_apply.1} parent=1 // pred_check
      _
    $region7: #{_apply.1} parent=1 // pred_check_branch
      %15 = sbr.rel (0) target = $region9
    $region8: #{_apply.1} parent=1 // pred_region
      %s17 = ssub.s32 4096, 4096
      %18 = vsyncadd [#allocation3], %s17
      %s19 = sshll.u32 [#allocation2], 4
      %s20 = int_to_ptr.vmem [resolvable:$true] %s19
      %25 = dma.hbm_to_vmem [thread:$0]  %s1, 4096, %s20, [#allocation3], 256, 256, 16
    $region9: #{_apply.1} parent=1 // pred_fallthru
      _
    // Predicated region
    $region10: #{_apply.1} parent=1 // pred_check
      _
    $region11: #{_apply.1} parent=1 // pred_check_branch
      %27 = sbr.rel (0) target = $region13
    $region12: #{_apply.1} parent=1 // pred_region
      _
    $region13: #{_apply.1} parent=1 // pred_fallthru
      _
    // Predicated region
    $region14: #{_apply.1} parent=1 // pred_check
      _
    $region15: #{_apply.1} parent=1 // pred_check_branch
      %29 = sbr.rel (0) target = $region17
    $region16: #{_apply.1} parent=1 // pred_region
      %s31 = ssub.s32 4096, 4096
      %32 = vsyncadd [#allocation5], %s31
      %s33 = sshll.u32 [#allocation4], 4
      %s34 = int_to_ptr.vmem [resolvable:$true] %s33
      %39 = dma.hbm_to_vmem [thread:$0]  %s3, 4096, %s34, [#allocation5], 128, 128, 8
    $region17: #{_apply.1} parent=1 // pred_fallthru
      _
    // Predicated region
    $region18: #{_apply.1} parent=1 // pred_check
      _
    $region19: #{_apply.1} parent=1 // pred_check_branch
      %41 = sbr.rel (0) target = $region21
    $region20: #{_apply.1} parent=1 // pred_region
      _
    $region21: #{_apply.1} parent=1 // pred_fallthru
      _
    // Predicated region
    $region22: #{_apply.1} parent=1 // pred_check
      _
    $region23: #{_apply.1} parent=1 // pred_check_branch
      %43 = sbr.rel (0) target = $region25
    $region24: #{_apply.1} parent=1 // pred_region
      %44 = dma.done [#allocation3], 4096
    $region25: #{_apply.1} parent=1 // pred_fallthru
      _
    // Predicated region
    $region26: #{_apply.1} parent=1 // pred_check
      _
    $region27: #{_apply.1} parent=1 // pred_check_branch
      %46 = sbr.rel (0) target = $region29
    $region28: #{_apply.1} parent=1 // pred_region
      %47 = dma.done [#allocation5], 4096
    $region29: #{_apply.1} parent=1 // pred_fallthru
      _
    %v48 = vld [vmem:[%s0] sm:$0xff]
    %v49 = vld [vmem:[%s0 + $0x8] sm:$0xff]
    %v50 = vld [vmem:[#allocation2] sm:$0xff]
    %v51 = vld [vmem:[#allocation2 + $0x8] sm:$0xff]
    %v52 = vld [vmem:[#allocation2 + $0x10] sm:$0xff]
    %v53 = vld [vmem:[#allocation2 + $0x18] sm:$0xff]
    %v54 = vld [vmem:[#allocation2 + $0x20] sm:$0xff]
    %v55 = vld [vmem:[#allocation2 + $0x28] sm:$0xff]
    %v56 = vld [vmem:[#allocation2 + $0x30] sm:$0xff]
    %v57 = vld [vmem:[#allocation2 + $0x38] sm:$0xff]
    %v58 = vld [vmem:[#allocation2 + $0x40] sm:$0xff]
    %v59 = vld [vmem:[#allocation2 + $0x48] sm:$0xff]
    %v60 = vld [vmem:[#allocation2 + $0x50] sm:$0xff]
    %v61 = vld [vmem:[#allocation2 + $0x58] sm:$0xff]
    %v62 = vld [vmem:[#allocation2 + $0x60] sm:$0xff]
    %v63 = vld [vmem:[#allocation2 + $0x68] sm:$0xff]
    %v64 = vld [vmem:[#allocation2 + $0x70] sm:$0xff]
    %v65 = vld [vmem:[#allocation2 + $0x78] sm:$0xff]
    %v66 = vld [vmem:[#allocation2 + $0x80] sm:$0xff]
    %v67 = vld [vmem:[#allocation2 + $0x88] sm:$0xff]
    %v68 = vld [vmem:[#allocation2 + $0x90] sm:$0xff]
    %v69 = vld [vmem:[#allocation2 + $0x98] sm:$0xff]
    %v70 = vld [vmem:[#allocation2 + $0xa0] sm:$0xff]
    %v71 = vld [vmem:[#allocation2 + $0xa8] sm:$0xff]
    %v72 = vld [vmem:[#allocation2 + $0xb0] sm:$0xff]
    %v73 = vld [vmem:[#allocation2 + $0xb8] sm:$0xff]
    %v74 = vld [vmem:[#allocation2 + $0xc0] sm:$0xff]
    %v75 = vld [vmem:[#allocation2 + $0xc8] sm:$0xff]
    %v76 = vld [vmem:[#allocation2 + $0xd0] sm:$0xff]
    %v77 = vld [vmem:[#allocation2 + $0xd8] sm:$0xff]
    %v78 = vld [vmem:[#allocation2 + $0xe0] sm:$0xff]
    %v79 = vld [vmem:[#allocation2 + $0xe8] sm:$0xff]
    %v80 = vld [vmem:[#allocation2 + $0xf0] sm:$0xff]
    %v81 = vld [vmem:[#allocation2 + $0xf8] sm:$0xff]
    %v82 = vld [vmem:[%s2] sm:$0x3]
    %v84 = vlaneseq
    %v85 = vshrl.u32 %v84, 7
    %v86 = vsub.s32 0, %v85
    %v87 = vrot.slane %v82, %v86
    %v88 = vlaneseq
    %v89 = vshrl.u32 %v88, 7
    %v90 = vsub.s32 1, %v89
    %v91 = vrot.slane %v82, %v90
    %94 = vmatprep.subr.mxu0 %v81
    %95 = vmatpush1.msra.mxu0 %v80
    %96 = vmatprep.subr.mxu0 %v79
    %97 = vmatpush1.msra.mxu0 %v78
    %98 = vmatprep.subr.mxu0 %v77
    %99 = vmatpush1.msra.mxu0 %v76
    %100 = vmatprep.subr.mxu0 %v75
    %101 = vmatpush1.msra.mxu0 %v74
    %102 = vmatprep.subr.mxu0 %v73
    %103 = vmatpush1.msra.mxu0 %v72
    %104 = vmatprep.subr.mxu0 %v71
    %105 = vmatpush1.msra.mxu0 %v70
    %106 = vmatprep.subr.mxu0 %v69
    %107 = vmatpush1.msra.mxu0 %v68
    %108 = vmatprep.subr.mxu0 %v67
    %109 = vmatpush1.msra.mxu0 %v66
    %110 = vmatprep.subr.mxu0 %v65
    %111 = vmatpush1.msra.mxu0 %v64
    %112 = vmatprep.subr.mxu0 %v63
    %113 = vmatpush1.msra.mxu0 %v62
    %114 = vmatprep.subr.mxu0 %v61
    %115 = vmatpush1.msra.mxu0 %v60
    %116 = vmatprep.subr.mxu0 %v59
    %117 = vmatpush1.msra.mxu0 %v58
    %118 = vmatprep.subr.mxu0 %v57
    %119 = vmatpush1.msra.mxu0 %v56
    %120 = vmatprep.subr.mxu0 %v55
    %121 = vmatpush1.msra.mxu0 %v54
    %122 = vmatprep.subr.mxu0 %v53
    %123 = vmatpush1.msra.mxu0 %v52
    %124 = vmatprep.subr.mxu0 %v51
    %125 = vmatpush1.msra.mxu0 %v50
    %126 = vmatprep.subr.mxu0 0.0
    %127 = vmatpush2.msra.mxu0 0.0
    %128 = vmatprep.subr.mxu0 0.0
    %129 = vmatpush2.msra.mxu0 0.0
    %130 = vmatprep.subr.mxu0 0.0
    %131 = vmatpush2.msra.mxu0 0.0
    %132 = vmatprep.subr.mxu0 0.0
    %133 = vmatpush2.msra.mxu0 0.0
    %134 = vmatprep.subr.mxu0 0.0
    %135 = vmatpush2.msra.mxu0 0.0
    %136 = vmatprep.subr.mxu0 0.0
    %137 = vmatpush2.msra.mxu0 0.0
    %138 = vmatprep.subr.mxu0 0.0
    %139 = vmatpush2.msra.mxu0 0.0
    %140 = vmatprep.subr.mxu0 0.0
    %141 = vmatpush2.msra.mxu0 0.0
    %142 = vmatprep.subr.mxu0 0.0
    %143 = vmatpush2.msra.mxu0 0.0
    %144 = vmatprep.subr.mxu0 0.0
    %145 = vmatpush2.msra.mxu0 0.0
    %146 = vmatprep.subr.mxu0 0.0
    %147 = vmatpush2.msra.mxu0 0.0
    %148 = vmatprep.subr.mxu0 0.0
    %149 = vmatpush2.msra.mxu0 0.0
    %150 = vmatprep.subr.mxu0 0.0
    %151 = vmatpush2.msra.mxu0 0.0
    %152 = vmatprep.subr.mxu0 0.0
    %153 = vmatpush2.msra.mxu0 0.0
    %154 = vmatprep.subr.mxu0 0.0
    %155 = vmatpush2.msra.mxu0 0.0
    %156 = vmatprep.subr.mxu0 0.0
    %157 = vmatpush2.msra.mxu0 0.0
    %158 = vmatprep.mubr.f32.mxu0 0.0
    %159 = vmatmul.mubr.f32.gmra.mxu0 %v48
    %v160 = vpop.f32.mrf.mxu0
    %v161 = vadd.f32 %v87, %v160
    %v162 = vpop.f32.mrf.mxu0
    %v163 = vadd.f32 %v91, %v162
    %164 = vmatprep.mubr.f32.mxu0 0.0
    %165 = vmatmul.mubr.f32.gmra.mxu0 %v49
    %v166 = vpop.f32.mrf.mxu0
    %v167 = vadd.f32 %v87, %v166
    %v168 = vpop.f32.mrf.mxu0
    %v169 = vadd.f32 %v91, %v168
    %170 = vdwg.mxu0
    %v171 = vmax.f32 %v161, 0.0
    %v172 = vmax.f32 %v163, 0.0
    %v173 = vmax.f32 %v167, 0.0
    %v174 = vmax.f32 %v169, 0.0
    %v175 = vld [vmem:[#allocation4] sm:$0xff]
    %v176 = vld [vmem:[#allocation4 + $0x8] sm:$0xff]
    %v177 = vld [vmem:[#allocation4 + $0x10] sm:$0xff]
    %v178 = vld [vmem:[#allocation4 + $0x18] sm:$0xff]
    %v179 = vld [vmem:[#allocation4 + $0x20] sm:$0xff]
    %v180 = vld [vmem:[#allocation4 + $0x28] sm:$0xff]
    %v181 = vld [vmem:[#allocation4 + $0x30] sm:$0xff]
    %v182 = vld [vmem:[#allocation4 + $0x38] sm:$0xff]
    %v183 = vld [vmem:[#allocation4 + $0x40] sm:$0xff]
    %v184 = vld [vmem:[#allocation4 + $0x48] sm:$0xff]
    %v185 = vld [vmem:[#allocation4 + $0x50] sm:$0xff]
    %v186 = vld [vmem:[#allocation4 + $0x58] sm:$0xff]
    %v187 = vld [vmem:[#allocation4 + $0x60] sm:$0xff]
    %v188 = vld [vmem:[#allocation4 + $0x68] sm:$0xff]
    %v189 = vld [vmem:[#allocation4 + $0x70] sm:$0xff]
    %v190 = vld [vmem:[#allocation4 + $0x78] sm:$0xff]
    %v191 = vld [vmem:[#allocation4 + $0x80] sm:$0xff]
    %v192 = vld [vmem:[#allocation4 + $0x88] sm:$0xff]
    %v193 = vld [vmem:[#allocation4 + $0x90] sm:$0xff]
    %v194 = vld [vmem:[#allocation4 + $0x98] sm:$0xff]
    %v195 = vld [vmem:[#allocation4 + $0xa0] sm:$0xff]
    %v196 = vld [vmem:[#allocation4 + $0xa8] sm:$0xff]
    %v197 = vld [vmem:[#allocation4 + $0xb0] sm:$0xff]
    %v198 = vld [vmem:[#allocation4 + $0xb8] sm:$0xff]
    %v199 = vld [vmem:[#allocation4 + $0xc0] sm:$0xff]
    %v200 = vld [vmem:[#allocation4 + $0xc8] sm:$0xff]
    %v201 = vld [vmem:[#allocation4 + $0xd0] sm:$0xff]
    %v202 = vld [vmem:[#allocation4 + $0xd8] sm:$0xff]
    %v203 = vld [vmem:[#allocation4 + $0xe0] sm:$0xff]
    %v204 = vld [vmem:[#allocation4 + $0xe8] sm:$0xff]
    %v205 = vld [vmem:[#allocation4 + $0xf0] sm:$0xff]
    %v206 = vld [vmem:[#allocation4 + $0xf8] sm:$0xff]
    %v207 = vld [vmem:[%s4] sm:$0x1]
    %v209 = vlaneseq
    %v210 = vshrl.u32 %v209, 7
    %v211 = vsub.s32 0, %v210
    %v212 = vrot.slane %v207, %v211
    %214 = vmatprep.subr.mxu0 0.0
    %215 = vmatpush1.msra.mxu0 %v190
    %216 = vmatprep.subr.mxu0 0.0
    %217 = vmatpush1.msra.mxu0 %v189
    %218 = vmatprep.subr.mxu0 0.0
    %219 = vmatpush1.msra.mxu0 %v188
    %220 = vmatprep.subr.mxu0 0.0
    %221 = vmatpush1.msra.mxu0 %v187
    %222 = vmatprep.subr.mxu0 0.0
    %223 = vmatpush1.msra.mxu0 %v186
    %224 = vmatprep.subr.mxu0 0.0
    %225 = vmatpush1.msra.mxu0 %v185
    %226 = vmatprep.subr.mxu0 0.0
    %227 = vmatpush1.msra.mxu0 %v184
    %228 = vmatprep.subr.mxu0 0.0
    %229 = vmatpush1.msra.mxu0 %v183
    %230 = vmatprep.subr.mxu0 0.0
    %231 = vmatpush1.msra.mxu0 %v182
    %232 = vmatprep.subr.mxu0 0.0
    %233 = vmatpush1.msra.mxu0 %v181
    %234 = vmatprep.subr.mxu0 0.0
    %235 = vmatpush1.msra.mxu0 %v180
    %236 = vmatprep.subr.mxu0 0.0
    %237 = vmatpush1.msra.mxu0 %v179
    %238 = vmatprep.subr.mxu0 0.0
    %239 = vmatpush1.msra.mxu0 %v178
    %240 = vmatprep.subr.mxu0 0.0
    %241 = vmatpush1.msra.mxu0 %v177
    %242 = vmatprep.subr.mxu0 0.0
    %243 = vmatpush1.msra.mxu0 %v176
    %244 = vmatprep.subr.mxu0 0.0
    %245 = vmatpush1.msra.mxu0 %v175
    %246 = vmatprep.subr.mxu0 0.0
    %247 = vmatpush2.msra.mxu0 %v206
    %248 = vmatprep.subr.mxu0 0.0
    %249 = vmatpush2.msra.mxu0 %v205
    %250 = vmatprep.subr.mxu0 0.0
    %251 = vmatpush2.msra.mxu0 %v204
    %252 = vmatprep.subr.mxu0 0.0
    %253 = vmatpush2.msra.mxu0 %v203
    %254 = vmatprep.subr.mxu0 0.0
    %255 = vmatpush2.msra.mxu0 %v202
    %256 = vmatprep.subr.mxu0 0.0
    %257 = vmatpush2.msra.mxu0 %v201
    %258 = vmatprep.subr.mxu0 0.0
    %259 = vmatpush2.msra.mxu0 %v200
    %260 = vmatprep.subr.mxu0 0.0
    %261 = vmatpush2.msra.mxu0 %v199
    %262 = vmatprep.subr.mxu0 0.0
    %263 = vmatpush2.msra.mxu0 %v198
    %264 = vmatprep.subr.mxu0 0.0
    %265 = vmatpush2.msra.mxu0 %v197
    %266 = vmatprep.subr.mxu0 0.0
    %267 = vmatpush2.msra.mxu0 %v196
    %268 = vmatprep.subr.mxu0 0.0
    %269 = vmatpush2.msra.mxu0 %v195
    %270 = vmatprep.subr.mxu0 0.0
    %271 = vmatpush2.msra.mxu0 %v194
    %272 = vmatprep.subr.mxu0 0.0
    %273 = vmatpush2.msra.mxu0 %v193
    %274 = vmatprep.subr.mxu0 0.0
    %275 = vmatpush2.msra.mxu0 %v192
    %276 = vmatprep.subr.mxu0 0.0
    %277 = vmatpush2.msra.mxu0 %v191
    %278 = vmatprep.mubr.f32.mxu0 %v172
    %279 = vmatmul.mubr.f32.gmra.mxu0 %v171
    %v280 = vpop.f32.mrf.mxu0
    %v281 = vadd.f32 %v212, %v280
    %v282 = vpop.f32.mrf.mxu0
    %283 = vmatprep.mubr.f32.mxu0 %v174
    %284 = vmatmul.mubr.f32.gmra.mxu0 %v173
    %v285 = vpop.f32.mrf.mxu0
    %v286 = vadd.f32 %v212, %v285
    %v287 = vpop.f32.mrf.mxu0
    %288 = vdwg.mxu0
    %289 = vst [vmem:[%s5] sm:$0xff] %v281
    %290 = vst [vmem:[%s5 + $0x8] sm:$0xff] %v286
    // Predicated region
    $region30: #{_apply.1} parent=1 // pred_check
      _
    $region31: #{_apply.1} parent=1 // pred_check_branch
      %292 = sbr.rel (0) target = $region33
    $region32: #{_apply.1} parent=1 // pred_region
      _
    $region33: #{_apply.1} parent=1 // pred_fallthru
      _
    // Predicated region
    $region34: #{_apply.1} parent=1 // pred_check
      _
    $region35: #{_apply.1} parent=1 // pred_check_branch
      %294 = sbr.rel (0) target = $region37
    $region36: #{_apply.1} parent=1 // pred_region
      _
    $region37: #{_apply.1} parent=1 // pred_fallthru
      _
    %295 = vsyncpa [#allocation3], 1
    %296 = vsyncpa [#allocation5], 1

</llo_original>
